<compile_context>
chip_gen: v7x
topology: tpu7x:2x2x1
jax: 0.10.0
libtpu: 0.0.40
codegen_flags: <defaults>
</compile_context>

<pallas_src>
import jax
import jax.numpy as jnp
from jax.experimental import pallas as pl
from jax.experimental.pallas import tpu as pltpu

EPS = 1e-5
LANE = 128


def _round_up(x, m):
    return (x + m - 1) // m * m


def _pick_tm(m):
    # MXU / sublane aligned M tile.  256 keeps double-buffered bf16 tiles well
    # under the v7x 64 MiB VMEM budget at ResNet-sized K (e.g. K=576).
    return 256 if m >= 256 else _round_up(m, 16)


# ----------------------------- Pallas kernels -------------------------------


def _gemm_bn_relu_kernel(p_ref, w_ref, s_ref, b_ref, o_ref):
    # y1 = relu((patches @ w1) * bn1_scale + bn1_bias)   (stored as bf16)
    acc = jnp.dot(p_ref[...], w_ref[...], preferred_element_type=jnp.float32)
    o_ref[...] = jnp.maximum(acc * s_ref[...] + b_ref[...], 0.0).astype(o_ref.dtype)


def _gemm_bn_add_relu_kernel(p_ref, w_ref, s_ref, b_ref, r_ref, o_ref):
    # Identity shortcut: out = relu((patches @ w2)*s2 + b2 + residual_tile).
    acc = jnp.dot(p_ref[...], w_ref[...], preferred_element_type=jnp.float32)
    y = acc * s_ref[...] + b_ref[...]
    o_ref[...] = jnp.maximum(y + r_ref[...].astype(jnp.float32), 0.0).astype(o_ref.dtype)


def _gemm_bn_add_ds_relu_kernel(p_ref, w_ref, s_ref, b_ref,
                                r_ref, wr_ref, sr_ref, br_ref, o_ref):
    # Downsample shortcut: out = relu((p@w2)*s2+b2 + (r@w_ds)*s_ds+b_ds).
    main = jnp.dot(p_ref[...], w_ref[...], preferred_element_type=jnp.float32)
    main = main * s_ref[...] + b_ref[...]
    res = jnp.dot(r_ref[...], wr_ref[...], preferred_element_type=jnp.float32)
    res = res * sr_ref[...] + br_ref[...]
    o_ref[...] = jnp.maximum(main + res, 0.0).astype(o_ref.dtype)


# --------------------------- pallas_call wrappers ----------------------------


def _conv_bn_relu(patches, w, scale, bias, out_dtype=jnp.bfloat16):
    M, K = patches.shape
    Cp = w.shape[1]
    tm = _pick_tm(M)
    Mp = _round_up(M, tm)
    if Mp != M:
        patches = jnp.pad(patches, ((0, Mp - M), (0, 0)))
    out = pl.pallas_call(
        _gemm_bn_relu_kernel,
        out_shape=jax.ShapeDtypeStruct((Mp, Cp), out_dtype),
        grid=(Mp // tm,),
        in_specs=[pl.BlockSpec((tm, K), lambda i: (i, 0)),
                  pl.BlockSpec((K, Cp), lambda i: (0, 0)),
                  pl.BlockSpec((1, Cp), lambda i: (0, 0)),
                  pl.BlockSpec((1, Cp), lambda i: (0, 0))],
        out_specs=pl.BlockSpec((tm, Cp), lambda i: (i, 0)),
        compiler_params=pltpu.CompilerParams(dimension_semantics=("parallel",)),
    )(patches, w, scale, bias)
    return out[:M]


def _conv_bn_add_relu(patches, w, scale, bias, residual, out_dtype=jnp.float32):
    M, K = patches.shape
    Cp = w.shape[1]
    tm = _pick_tm(M)
    Mp = _round_up(M, tm)
    if Mp != M:
        patches = jnp.pad(patches, ((0, Mp - M), (0, 0)))
        residual = jnp.pad(residual, ((0, Mp - M), (0, 0)))
    out = pl.pallas_call(
        _gemm_bn_add_relu_kernel,
        out_shape=jax.ShapeDtypeStruct((Mp, Cp), out_dtype),
        grid=(Mp // tm,),
        in_specs=[pl.BlockSpec((tm, K), lambda i: (i, 0)),
                  pl.BlockSpec((K, Cp), lambda i: (0, 0)),
                  pl.BlockSpec((1, Cp), lambda i: (0, 0)),
                  pl.BlockSpec((1, Cp), lambda i: (0, 0)),
                  pl.BlockSpec((tm, Cp), lambda i: (i, 0))],
        out_specs=pl.BlockSpec((tm, Cp), lambda i: (i, 0)),
        compiler_params=pltpu.CompilerParams(dimension_semantics=("parallel",)),
    )(patches, w, scale, bias, residual)
    return out[:M]


def _conv_bn_add_ds_relu(patches, w, scale, bias, r, wr, sr, br,
                         out_dtype=jnp.float32):
    M, K = patches.shape
    Cp = w.shape[1]
    Kr = r.shape[1]
    tm = _pick_tm(M)
    Mp = _round_up(M, tm)
    if Mp != M:
        patches = jnp.pad(patches, ((0, Mp - M), (0, 0)))
        r = jnp.pad(r, ((0, Mp - M), (0, 0)))
    out = pl.pallas_call(
        _gemm_bn_add_ds_relu_kernel,
        out_shape=jax.ShapeDtypeStruct((Mp, Cp), out_dtype),
        grid=(Mp // tm,),
        in_specs=[pl.BlockSpec((tm, K), lambda i: (i, 0)),
                  pl.BlockSpec((K, Cp), lambda i: (0, 0)),
                  pl.BlockSpec((1, Cp), lambda i: (0, 0)),
                  pl.BlockSpec((1, Cp), lambda i: (0, 0)),
                  pl.BlockSpec((tm, Kr), lambda i: (i, 0)),
                  pl.BlockSpec((Kr, Cp), lambda i: (0, 0)),
                  pl.BlockSpec((1, Cp), lambda i: (0, 0)),
                  pl.BlockSpec((1, Cp), lambda i: (0, 0))],
        out_specs=pl.BlockSpec((tm, Cp), lambda i: (i, 0)),
        compiler_params=pltpu.CompilerParams(dimension_semantics=("parallel",)),
    )(patches, w, scale, bias, r, wr, sr, br)
    return out[:M]


# ------------------------------ JAX glue ------------------------------------


def _im2col(x_nhwc, ksize, stride, padding):
    """Return (N*Ho*Wo, ksize*ksize*C) patches (kh, kw, c ordering along K)."""
    N, H, W, C = x_nhwc.shape
    xp = jnp.pad(x_nhwc, ((0, 0), (padding, padding), (padding, padding), (0, 0)))
    Ho = (H + 2 * padding - ksize) // stride + 1
    Wo = (W + 2 * padding - ksize) // stride + 1
    cols = []
    for kh in range(ksize):
        for kw in range(ksize):
            cols.append(xp[:, kh:kh + stride * Ho:stride, kw:kw + stride * Wo:stride, :])
    patches = jnp.concatenate(cols, axis=-1)               # (N, Ho, Wo, k*k*C)
    return patches.reshape(N * Ho * Wo, ksize * ksize * C), Ho, Wo


def _fold_bn(gamma, beta, mean, var, cout_p):
    # eval-mode BN folded to per-channel affine; (1, Cout_p) f32 rows.
    scale = gamma / jnp.sqrt(var + EPS)
    bias = beta - mean * scale
    scale = jnp.pad(scale, (0, cout_p - scale.shape[0]))
    bias = jnp.pad(bias, (0, cout_p - bias.shape[0]))
    return scale[None, :].astype(jnp.float32), bias[None, :].astype(jnp.float32)


def _oihw_to_km(w_oihw, cout_p):
    # (Cout, Cin, kh, kw) -> (kh*kw*Cin, Cout_p) bf16, matching im2col K order.
    cout, cin, kh, kw = w_oihw.shape
    w = jnp.transpose(w_oihw, (2, 3, 1, 0)).reshape(kh * kw * cin, cout)
    w = jnp.pad(w, ((0, 0), (0, cout_p - cout)))
    return w.astype(jnp.bfloat16)


def init_basic_block_params(key, in_ch, out_ch, stride):
    ks = list(jax.random.split(key, 6))

    def bn_params(k):
        k1, k2, k3, k4 = jax.random.split(k, 4)
        gamma = 0.5 + jax.random.uniform(k1, (out_ch,), jnp.float32)
        beta = 0.1 * jax.random.normal(k2, (out_ch,), jnp.float32)
        mean = 0.1 * jax.random.normal(k3, (out_ch,), jnp.float32)
        var = 0.5 + jax.random.uniform(k4, (out_ch,), jnp.float32)
        return (gamma, beta, mean, var)

    params = {
        'w1': 0.1 * jax.random.normal(ks[0], (out_ch, in_ch, 3, 3), jnp.float32),
        'bn1': bn_params(ks[1]),
        'w2': 0.1 * jax.random.normal(ks[2], (out_ch, out_ch, 3, 3), jnp.float32),
        'bn2': bn_params(ks[3]),
    }
    if stride != 1 or in_ch != out_ch:
        params['w_ds'] = 0.1 * jax.random.normal(ks[4], (out_ch, in_ch, 1, 1), jnp.float32)
        params['bn_ds'] = bn_params(ks[5])
    return params


def basic_block_forward(params, x_nchw, stride):
    N, in_ch, H, W = x_nchw.shape
    out_ch = params['w1'].shape[0]
    cout_p = _round_up(out_ch, LANE)
    has_ds = 'w_ds' in params

    # bf16 activations for the MXU / HBM traffic; BN math stays f32 in-kernel.
    x_nhwc = jnp.transpose(x_nchw, (0, 2, 3, 1)).astype(jnp.bfloat16)

    # conv1 (3x3, stride, pad=1) + bn1 + relu  -- fused, tiled Pallas GEMM.
    p1, Ho, Wo = _im2col(x_nhwc, 3, stride, 1)
    s1, b1 = _fold_bn(*params['bn1'], cout_p)
    y1 = _conv_bn_relu(p1, _oihw_to_km(params['w1'], cout_p), s1, b1)
    y1_nhwc = y1[:, :out_ch].reshape(N, Ho, Wo, out_ch)          # bf16

    # conv2 (3x3, stride 1, pad=1) + bn2 + shortcut add + relu -- fused GEMM.
    p2, _, _ = _im2col(y1_nhwc, 3, 1, 1)
    s2, b2 = _fold_bn(*params['bn2'], cout_p)
    w2 = _oihw_to_km(params['w2'], cout_p)
    if has_ds:
        # 1x1 strided downsample conv + BN fused into the same kernel.
        r = x_nhwc[:, ::stride, ::stride, :].reshape(N * Ho * Wo, in_ch)
        wr = _oihw_to_km(params['w_ds'], cout_p)
        sr, br = _fold_bn(*params['bn_ds'], cout_p)
        y2 = _conv_bn_add_ds_relu(p2, w2, s2, b2, r, wr, sr, br)
    else:
        # Identity shortcut: plain VPU add of the input tile (no eye-GEMM).
        r = x_nhwc.reshape(N * Ho * Wo, in_ch)
        r = jnp.pad(r, ((0, 0), (0, cout_p - in_ch)))
        y2 = _conv_bn_add_relu(p2, w2, s2, b2, r)

    out = y2[:, :out_ch].reshape(N, Ho, Wo, out_ch)
    return jnp.transpose(out, (0, 3, 1, 2))


# --------------------------- pure-JAX reference ------------------------------


def _ref_forward(params, x, stride):
    def conv(x, w, s, pad):
        return jax.lax.conv_general_dilated(
            x, w, (s, s), [(pad, pad), (pad, pad)],
            dimension_numbers=('NCHW', 'OIHW', 'NCHW'))

    def bn(x, stats):
        g, b, m, v = stats
        return ((x - m[None, :, None, None]) / jnp.sqrt(v[None, :, None, None] + EPS)
                * g[None, :, None, None] + b[None, :, None, None])

    out = jax.nn.relu(bn(conv(x, params['w1'], stride, 1), params['bn1']))
    out = bn(conv(out, params['w2'], 1, 1), params['bn2'])
    sc = bn(conv(x, params['w_ds'], stride, 0), params['bn_ds']) if 'w_ds' in params else x
    return jax.nn.relu(out + sc)


if __name__ == "__main__":
    key = jax.random.PRNGKey(0)

    def run_case(name, in_ch, out_ch, stride, hw, k):
        kx, kp = jax.random.split(k)
        x = jax.random.normal(kx, (2, in_ch, hw, hw), jnp.float32)
        params = init_basic_block_params(kp, in_ch, out_ch, stride)
        out = jax.block_until_ready(basic_block_forward(params, x, stride))
        ref = jax.block_until_ready(_ref_forward(params, x, stride))
        assert out.shape == ref.shape, (name, out.shape, ref.shape)
        # bf16 MXU operands -> slightly looser tolerance than pure f32.
        if not jnp.allclose(out, ref, atol=5e-2, rtol=5e-2):
            err = float(jnp.max(jnp.abs(out - ref)))
            raise AssertionError(f"{name}: Pallas BasicBlock mismatch (max abs err {err})")

    k1, k2 = jax.random.split(key)
    # Downsample path: 1x1 strided conv + BN shortcut, fused into kernel 2.
    run_case("downsample", in_ch=4, out_ch=8, stride=2, hw=16, k=k1)
    # Identity path: plain residual add; M=512 -> multi-tile (grid=2) pipeline.
    run_case("identity", in_ch=8, out_ch=8, stride=1, hw=16, k=k2)
    print("KERNEL_OK")
</pallas_src>

<mosaic_0001>
module attributes {stable_mosaic.version = 11 : i64} {
  func.func @_gemm_bn_relu_kernel(%arg0: i32, %arg1: memref<128x36xbf16, #tpu.memory_space<vmem>>, %arg2: memref<36x128xbf16, #tpu.memory_space<vmem>>, %arg3: memref<1x128xf32, #tpu.memory_space<vmem>>, %arg4: memref<1x128xf32, #tpu.memory_space<vmem>>, %arg5: memref<128x128xbf16, #tpu.memory_space<vmem>>) attributes {dimension_semantics = [#tpu.dimension_semantics<parallel>], iteration_bounds = array<i64: 1>, scalar_prefetch = 0 : i64, scratch_operands = 0 : i64, tpu.core_type = #tpu.core_type<tc>, window_params = [{transform_indices = @transform_0, window_bounds = array<i64: 128, 36>}, {pipeline_mode = #tpu.pipeline_mode<synchronous>, transform_indices = @transform_1, window_bounds = array<i64: 36, 128>}, {pipeline_mode = #tpu.pipeline_mode<synchronous>, transform_indices = @transform_2, window_bounds = array<i64: 1, 128>}, {pipeline_mode = #tpu.pipeline_mode<synchronous>, transform_indices = @transform_3, window_bounds = array<i64: 1, 128>}, {transform_indices = @transform_4, window_bounds = array<i64: 128, 128>}]} {
    %c0 = arith.constant 0 : index
    %c0_0 = arith.constant 0 : index
    %0 = vector.load %arg1[%c0, %c0_0] : memref<128x36xbf16, #tpu.memory_space<vmem>>, vector<128x36xbf16>
    %c0_1 = arith.constant 0 : index
    %c0_2 = arith.constant 0 : index
    %1 = vector.load %arg2[%c0_1, %c0_2] : memref<36x128xbf16, #tpu.memory_space<vmem>>, vector<36x128xbf16>
    %cst = arith.constant dense<0.000000e+00> : vector<128x128xf32>
    %2 = tpu.matmul %0, %1, %cst {dimension_numbers = #tpu.dot_dimension_numbers<[1], [0], [0], [1], [0, 0, 1, 1], [], []>} : vector<128x36xbf16>, vector<36x128xbf16>, vector<128x128xf32> -> vector<128x128xf32>
    %c0_3 = arith.constant 0 : index
    %c0_4 = arith.constant 0 : index
    %3 = vector.load %arg3[%c0_3, %c0_4] : memref<1x128xf32, #tpu.memory_space<vmem>>, vector<1x128xf32>
    %4 = vector.broadcast %3 : vector<1x128xf32> to vector<128x128xf32>
    %5 = arith.mulf %2, %4 : vector<128x128xf32>
    %c0_5 = arith.constant 0 : index
    %c0_6 = arith.constant 0 : index
    %6 = vector.load %arg4[%c0_5, %c0_6] : memref<1x128xf32, #tpu.memory_space<vmem>>, vector<1x128xf32>
    %7 = vector.broadcast %6 : vector<1x128xf32> to vector<128x128xf32>
    %8 = arith.addf %5, %7 : vector<128x128xf32>
    %cst_7 = arith.constant 0.000000e+00 : f32
    %9 = vector.broadcast %cst_7 : f32 to vector<128x128xf32>
    %10 = arith.maximumf %8, %9 : vector<128x128xf32>
    %11 = arith.truncf %10 : vector<128x128xf32> to vector<128x128xbf16>
    %c0_8 = arith.constant 0 : index
    %c0_9 = arith.constant 0 : index
    %12 = vector.load %arg5[%c0_8, %c0_9] : memref<128x128xbf16, #tpu.memory_space<vmem>>, vector<128x128xbf16>
    tpu.vector_store %arg5[%c0_8, %c0_9], %11 {strides = array<i32>} : memref<128x128xbf16, #tpu.memory_space<vmem>>, vector<128x128xbf16>,
    return
  }
  func.func @transform_0(%arg0: i32) -> (i32, i32) {
    %c0_i32 = arith.constant 0 : i32
    %c0_i32_0 = arith.constant 0 : i32
    return %arg0, %c0_i32 : i32, i32
  }
  func.func @transform_1(%arg0: i32) -> (i32, i32) {
    %c0_i32 = arith.constant 0 : i32
    %c0_i32_0 = arith.constant 0 : i32
    %c0_i32_1 = arith.constant 0 : i32
    return %c0_i32, %c0_i32_0 : i32, i32
  }
  func.func @transform_2(%arg0: i32) -> (i32, i32) {
    %c0_i32 = arith.constant 0 : i32
    %c0_i32_0 = arith.constant 0 : i32
    %c0_i32_1 = arith.constant 0 : i32
    return %c0_i32, %c0_i32_0 : i32, i32
  }
  func.func @transform_3(%arg0: i32) -> (i32, i32) {
    %c0_i32 = arith.constant 0 : i32
    %c0_i32_0 = arith.constant 0 : i32
    %c0_i32_1 = arith.constant 0 : i32
    return %c0_i32, %c0_i32_0 : i32, i32
  }
  func.func @transform_4(%arg0: i32) -> (i32, i32) {
    %c0_i32 = arith.constant 0 : i32
    %c0_i32_0 = arith.constant 0 : i32
    return %arg0, %c0_i32 : i32, i32
  }
}

</mosaic_0001>

<llo_original>
// kernel: tpu_custom_call.1
$region0: #{tpu_custom_call.1}
  #allocation0 [shape = 'u32[]', space=smem, size = 0x4, offset = 0x4, fixed_abs, tag = 'smem constant byte address 0x4 - core index']
  #allocation1 [shape = 'u32[144,128]{1,0:T(1,128)}', space=vmem, size = 0x12000, scoped, tag = 'internal scratch']
  %s0 = inlined_call_operand.vmem [shape: bf16[128,36], index: 0, kind: input, shape index: {}]
  %s1 = inlined_call_operand.vmem [shape: bf16[36,128], index: 1, kind: input, shape index: {}]
  %s2 = inlined_call_operand.vmem [shape: f32[1,128], index: 2, kind: input, shape index: {}]
  %s3 = inlined_call_operand.vmem [shape: f32[1,128], index: 3, kind: input, shape index: {}]
  %s4 = inlined_call_operand.hbm [shape: bf16[128,128], index: 4, kind: output, shape index: {}]
  %s5 = sld [smem:[#allocation0]]
  $region26: #{tpu_custom_call.1} parent=0
    _
  %s7 = ssub.s32 1, %s5
  %s8 = scalar_select 0, %s7, %s5
  $region1: #{tpu_custom_call.1} parent=0
    #allocation2 [shape = 'u8[32768]{0}', space=vmem, size = 0x8000, scoped, tag = 'output window, operand 0, single buffered']
    #allocation3 [shape = 's32[1]{0}', space=sflag, size = 0x4, scoped, tag = 'scoped memory for tpu_custom_call.1']
    %9 = vsyncpa [#allocation3], 0
    // Predicated region
    $region2: #{tpu_custom_call.1} parent=1 // pred_check
      _
    $region3: #{tpu_custom_call.1} parent=1 // pred_check_branch
      %11 = sbr.rel (0) target = $region5
    $region4: #{tpu_custom_call.1} parent=1 // pred_region
      _
    $region5: #{tpu_custom_call.1} parent=1 // pred_fallthru
      _
    // Predicated region
    $region6: #{tpu_custom_call.1} parent=1 // pred_check
      _
    $region7: #{tpu_custom_call.1} parent=1 // pred_check_branch
      %13 = sbr.rel (0) target = $region9
    $region8: #{tpu_custom_call.1} parent=1 // pred_region
      _
    $region9: #{tpu_custom_call.1} parent=1 // pred_fallthru
      _
    // Predicated region
    $region10: #{tpu_custom_call.1} parent=1 // pred_check
      _
    $region11: #{tpu_custom_call.1} parent=1 // pred_check_branch
      %15 = sbr.rel (0) target = $region13
    $region12: #{tpu_custom_call.1} parent=1 // pred_region
      _
    $region13: #{tpu_custom_call.1} parent=1 // pred_fallthru
      _
    // Predicated region
    $region14: #{tpu_custom_call.1} parent=1 // pred_check
      _
    $region15: #{tpu_custom_call.1} parent=1 // pred_check_branch
      %17 = sbr.rel (0) target = $region17
    $region16: #{tpu_custom_call.1} parent=1 // pred_region
      _
    $region17: #{tpu_custom_call.1} parent=1 // pred_fallthru
      _
    %v19 = vld [vmem:[%s0] sm:$0xf]
    %v20 = vld [vmem:[%s0 + $0x4] sm:$0xf]
    %v21 = vld [vmem:[%s0 + $0x8] sm:$0xf]
    %v22 = vld [vmem:[%s0 + $0xc] sm:$0xf]
    %v23 = vld [vmem:[%s0 + $0x10] sm:$0xf]
    %v24 = vld [vmem:[%s0 + $0x14] sm:$0xf]
    %v25 = vld [vmem:[%s0 + $0x18] sm:$0xf]
    %v26 = vld [vmem:[%s0 + $0x1c] sm:$0xf]
    %v27 = vld [vmem:[%s0 + $0x20] sm:$0xf]
    %v28 = vld [vmem:[%s0 + $0x24] sm:$0xf]
    %v29 = vld [vmem:[%s0 + $0x28] sm:$0xf]
    %v30 = vld [vmem:[%s0 + $0x2c] sm:$0xf]
    %v31 = vld [vmem:[%s0 + $0x30] sm:$0xf]
    %v32 = vld [vmem:[%s0 + $0x34] sm:$0xf]
    %v33 = vld [vmem:[%s0 + $0x38] sm:$0xf]
    %v34 = vld [vmem:[%s0 + $0x3c] sm:$0xf]
    %v35 = vld [vmem:[%s1] sm:$0xf]
    %v36 = vld [vmem:[%s1 + $0x4] sm:$0xf]
    %v37 = vld [vmem:[%s1 + $0x8] sm:$0xf]
    %v38 = vld [vmem:[%s1 + $0xc] sm:$0xf]
    %v39 = vld [vmem:[%s1 + $0x10] sm:$0x3]
    %v56 = vunpack.c.l.b16 %v19
    %v57 = vunpack.c.l.b16 %v20
    %v58 = vunpack.c.l.b16 %v21
    %v59 = vunpack.c.l.b16 %v22
    %v60 = vunpack.c.l.b16 %v23
    %v61 = vunpack.c.l.b16 %v24
    %v62 = vunpack.c.l.b16 %v25
    %v63 = vunpack.c.l.b16 %v26
    %v64 = vunpack.c.l.b16 %v27
    %v65 = vunpack.c.l.b16 %v28
    %v66 = vunpack.c.l.b16 %v29
    %v67 = vunpack.c.l.b16 %v30
    %v68 = vunpack.c.l.b16 %v31
    %v69 = vunpack.c.l.b16 %v32
    %v70 = vunpack.c.l.b16 %v33
    %v71 = vunpack.c.l.b16 %v34
    %v72 = vpack.c.b16 %v57, %v56
    %v73 = vpack.c.b16 %v59, %v58
    %v74 = vpack.c.b16 %v61, %v60
    %v75 = vpack.c.b16 %v63, %v62
    %v76 = vpack.c.b16 %v65, %v64
    %v77 = vpack.c.b16 %v67, %v66
    %v78 = vpack.c.b16 %v69, %v68
    %v79 = vpack.c.b16 %v71, %v70
    %v85 = vunpack.c.l.b16 %v35
    %v86 = vunpack.c.l.b16 %v36
    %v87 = vunpack.c.l.b16 %v37
    %v88 = vunpack.c.l.b16 %v38
    %v89 = vunpack.c.l.b16 %v39
    %v90 = vpack.c.b16 %v86, %v85
    %v91 = vpack.c.b16 %v88, %v87
    %v92 = vpack.c.b16 %v89, %v89
    %vm95 = vcmask 293888
    %v97 = vsel %vm95, %v72, 0
    %v100 = vsel %vm95, %v73, 0
    %v103 = vsel %vm95, %v74, 0
    %v106 = vsel %vm95, %v75, 0
    %v109 = vsel %vm95, %v76, 0
    %v112 = vsel %vm95, %v77, 0
    %v115 = vsel %vm95, %v78, 0
    %v118 = vsel %vm95, %v79, 0
    %vm120 = vcmask 1041408
    %v122 = vsel %vm120, %v92, 0
    %124 = vmatprep.subr.bf16.mxu0 0
    %125 = vmatpush1.bf16.msra.mxu0 %v90
    %126 = vmatprep.subr.bf16.mxu0 0
    %127 = vmatpush1.bf16.msra.mxu0 %v91
    %128 = vmatprep.subr.bf16.mxu0 0
    %129 = vmatpush1.bf16.msra.mxu0 %v122
    %130 = vmatprep.subr.bf16.mxu0 0
    %131 = vmatpush1.bf16.msra.mxu0 0
    %132 = vmatprep.subr.bf16.mxu0 0
    %133 = vmatpush1.bf16.msra.mxu0 0
    %134 = vmatprep.subr.bf16.mxu0 0
    %135 = vmatpush1.bf16.msra.mxu0 0
    %136 = vmatprep.subr.bf16.mxu0 0
    %137 = vmatpush1.bf16.msra.mxu0 0
    %138 = vmatprep.subr.bf16.mxu0 0
    %139 = vmatpush1.bf16.msra.mxu0 0
    %140 = vmatprep.subr.bf16.mxu0 0
    %141 = vmatpush1.bf16.msra.mxu0 0
    %142 = vmatprep.subr.bf16.mxu0 0
    %143 = vmatpush1.bf16.msra.mxu0 0
    %144 = vmatprep.subr.bf16.mxu0 0
    %145 = vmatpush1.bf16.msra.mxu0 0
    %146 = vmatprep.subr.bf16.mxu0 0
    %147 = vmatpush1.bf16.msra.mxu0 0
    %148 = vmatprep.subr.bf16.mxu0 0
    %149 = vmatpush1.bf16.msra.mxu0 0
    %150 = vmatprep.subr.bf16.mxu0 0
    %151 = vmatpush1.bf16.msra.mxu0 0
    %152 = vmatprep.subr.bf16.mxu0 0
    %153 = vmatpush1.bf16.msra.mxu0 0
    %154 = vmatprep.subr.bf16.mxu0 0
    %155 = vmatpush1.bf16.msra.mxu0 0
    %156 = vmatprep.mubr.bf16.mxu0 0
    %157 = vmatmul.mubr.bf16.gmra.mrb[0].mxu0 %v97
    %v158 = vpop.f32.mrb[0].mxu0
    %v159 = vadd.f32 0.0, %v158
    %v160 = vpop.f32.mrb[0].mxu0
    %v161 = vpop.f32.mrb[0].mxu0
    %v162 = vadd.f32 0.0, %v161
    %v163 = vpop.f32.mrb[0].mxu0
    %164 = vmatprep.mubr.bf16.mxu0 0
    %165 = vmatmul.mubr.bf16.gmra.mrb[0].mxu0 %v100
    %v166 = vpop.f32.mrb[0].mxu0
    %v167 = vadd.f32 0.0, %v166
    %v168 = vpop.f32.mrb[0].mxu0
    %v169 = vpop.f32.mrb[0].mxu0
    %v170 = vadd.f32 0.0, %v169
    %v171 = vpop.f32.mrb[0].mxu0
    %172 = vmatprep.mubr.bf16.mxu0 0
    %173 = vmatmul.mubr.bf16.gmra.mrb[0].mxu0 %v103
    %v174 = vpop.f32.mrb[0].mxu0
    %v175 = vadd.f32 0.0, %v174
    %v176 = vpop.f32.mrb[0].mxu0
    %v177 = vpop.f32.mrb[0].mxu0
    %v178 = vadd.f32 0.0, %v177
    %v179 = vpop.f32.mrb[0].mxu0
    %180 = vmatprep.mubr.bf16.mxu0 0
    %181 = vmatmul.mubr.bf16.gmra.mrb[0].mxu0 %v106
    %v182 = vpop.f32.mrb[0].mxu0
    %v183 = vadd.f32 0.0, %v182
    %v184 = vpop.f32.mrb[0].mxu0
    %v185 = vpop.f32.mrb[0].mxu0
    %v186 = vadd.f32 0.0, %v185
    %v187 = vpop.f32.mrb[0].mxu0
    %188 = vmatprep.mubr.bf16.mxu0 0
    %189 = vmatmul.mubr.bf16.gmra.mrb[0].mxu0 %v109
    %v190 = vpop.f32.mrb[0].mxu0
    %v191 = vadd.f32 0.0, %v190
    %v192 = vpop.f32.mrb[0].mxu0
    %v193 = vpop.f32.mrb[0].mxu0
    %v194 = vadd.f32 0.0, %v193
    %v195 = vpop.f32.mrb[0].mxu0
    %196 = vmatprep.mubr.bf16.mxu0 0
    %197 = vmatmul.mubr.bf16.gmra.mrb[0].mxu0 %v112
    %v198 = vpop.f32.mrb[0].mxu0
    %v199 = vadd.f32 0.0, %v198
    %v200 = vpop.f32.mrb[0].mxu0
    %v201 = vpop.f32.mrb[0].mxu0
    %v202 = vadd.f32 0.0, %v201
    %v203 = vpop.f32.mrb[0].mxu0
    %204 = vmatprep.mubr.bf16.mxu0 0
    %205 = vmatmul.mubr.bf16.gmra.mrb[0].mxu0 %v115
    %v206 = vpop.f32.mrb[0].mxu0
    %v207 = vadd.f32 0.0, %v206
    %v208 = vpop.f32.mrb[0].mxu0
    %v209 = vpop.f32.mrb[0].mxu0
    %v210 = vadd.f32 0.0, %v209
    %v211 = vpop.f32.mrb[0].mxu0
    %212 = vmatprep.mubr.bf16.mxu0 0
    %213 = vmatmul.mubr.bf16.gmra.mrb[0].mxu0 %v118
    %v214 = vpop.f32.mrb[0].mxu0
    %v215 = vadd.f32 0.0, %v214
    %v216 = vpop.f32.mrb[0].mxu0
    %v217 = vpop.f32.mrb[0].mxu0
    %v218 = vadd.f32 0.0, %v217
    %v219 = vpop.f32.mrb[0].mxu0
    %220 = vdwg.mxu0
    %v221 = vld [vmem:[%s2] sm:$0x1]
    %v223 = vlaneseq
    %v224 = vshrl.u32 %v223, 7
    %v225 = vsub.s32 0, %v224
    %v226 = vrot.slane %v221, %v225
    %v228 = vmul.f32 %v159, %v226
    %v229 = vmul.f32 %v162, %v226
    %v230 = vmul.f32 %v167, %v226
    %v231 = vmul.f32 %v170, %v226
    %v232 = vmul.f32 %v175, %v226
    %v233 = vmul.f32 %v178, %v226
    %v234 = vmul.f32 %v183, %v226
    %v235 = vmul.f32 %v186, %v226
    %v236 = vmul.f32 %v191, %v226
    %v237 = vmul.f32 %v194, %v226
    %v238 = vmul.f32 %v199, %v226
    %v239 = vmul.f32 %v202, %v226
    %v240 = vmul.f32 %v207, %v226
    %v241 = vmul.f32 %v210, %v226
    %v242 = vmul.f32 %v215, %v226
    %v243 = vmul.f32 %v218, %v226
    %v244 = vld [vmem:[%s3] sm:$0x1]
    %v246 = vlaneseq
    %v247 = vshrl.u32 %v246, 7
    %v248 = vsub.s32 0, %v247
    %v249 = vrot.slane %v244, %v248
    %v251 = vadd.f32 %v228, %v249
    %v252 = vadd.f32 %v229, %v249
    %v253 = vadd.f32 %v230, %v249
    %v254 = vadd.f32 %v231, %v249
    %v255 = vadd.f32 %v232, %v249
    %v256 = vadd.f32 %v233, %v249
    %v257 = vadd.f32 %v234, %v249
    %v258 = vadd.f32 %v235, %v249
    %v259 = vadd.f32 %v236, %v249
    %v260 = vadd.f32 %v237, %v249
    %v261 = vadd.f32 %v238, %v249
    %v262 = vadd.f32 %v239, %v249
    %v263 = vadd.f32 %v240, %v249
    %v264 = vadd.f32 %v241, %v249
    %v265 = vadd.f32 %v242, %v249
    %v266 = vadd.f32 %v243, %v249
    %v267 = vmax.f32 %v251, 0.0
    %v268 = vmax.f32 %v252, 0.0
    %v269 = vmax.f32 %v253, 0.0
    %v270 = vmax.f32 %v254, 0.0
    %v271 = vmax.f32 %v255, 0.0
    %v272 = vmax.f32 %v256, 0.0
    %v273 = vmax.f32 %v257, 0.0
    %v274 = vmax.f32 %v258, 0.0
    %v275 = vmax.f32 %v259, 0.0
    %v276 = vmax.f32 %v260, 0.0
    %v277 = vmax.f32 %v261, 0.0
    %v278 = vmax.f32 %v262, 0.0
    %v279 = vmax.f32 %v263, 0.0
    %v280 = vmax.f32 %v264, 0.0
    %v281 = vmax.f32 %v265, 0.0
    %v282 = vmax.f32 %v266, 0.0
    %v283 = vpack.c.bf16 %v268, %v267
    %v284 = vpack.c.bf16 %v270, %v269
    %v285 = vpack.c.bf16 %v272, %v271
    %v286 = vpack.c.bf16 %v274, %v273
    %v287 = vpack.c.bf16 %v276, %v275
    %v288 = vpack.c.bf16 %v278, %v277
    %v289 = vpack.c.bf16 %v280, %v279
    %v290 = vpack.c.bf16 %v282, %v281
    %v299 = vunpack.c.l.b16 %v283
    %v300 = vunpack.c.h.b16 %v283
    %v301 = vunpack.c.l.b16 %v284
    %v302 = vunpack.c.h.b16 %v284
    %v303 = vunpack.c.l.b16 %v285
    %v304 = vunpack.c.h.b16 %v285
    %v305 = vunpack.c.l.b16 %v286
    %v306 = vunpack.c.h.b16 %v286
    %v307 = vunpack.c.l.b16 %v287
    %v308 = vunpack.c.h.b16 %v287
    %v309 = vunpack.c.l.b16 %v288
    %v310 = vunpack.c.h.b16 %v288
    %v311 = vunpack.c.l.b16 %v289
    %v312 = vunpack.c.h.b16 %v289
    %v313 = vunpack.c.l.b16 %v290
    %v314 = vunpack.c.h.b16 %v290
    %v315 = vpack.c.b16 %v299, %v299
    %v316 = vpack.c.b16 %v300, %v300
    %v317 = vpack.c.b16 %v301, %v301
    %v318 = vpack.c.b16 %v302, %v302
    %v319 = vpack.c.b16 %v303, %v303
    %v320 = vpack.c.b16 %v304, %v304
    %v321 = vpack.c.b16 %v305, %v305
    %v322 = vpack.c.b16 %v306, %v306
    %v323 = vpack.c.b16 %v307, %v307
    %v324 = vpack.c.b16 %v308, %v308
    %v325 = vpack.c.b16 %v309, %v309
    %v326 = vpack.c.b16 %v310, %v310
    %v327 = vpack.c.b16 %v311, %v311
    %v328 = vpack.c.b16 %v312, %v312
    %v329 = vpack.c.b16 %v313, %v313
    %v330 = vpack.c.b16 %v314, %v314
    %347 = vst [vmem:[#allocation2] sm:$0xf] %v315
    %348 = vst [vmem:[#allocation2 + $0x4] sm:$0xf] %v316
    %349 = vst [vmem:[#allocation2 + $0x8] sm:$0xf] %v317
    %350 = vst [vmem:[#allocation2 + $0xc] sm:$0xf] %v318
    %351 = vst [vmem:[#allocation2 + $0x10] sm:$0xf] %v319
    %352 = vst [vmem:[#allocation2 + $0x14] sm:$0xf] %v320
    %353 = vst [vmem:[#allocation2 + $0x18] sm:$0xf] %v321
    %354 = vst [vmem:[#allocation2 + $0x1c] sm:$0xf] %v322
    %355 = vst [vmem:[#allocation2 + $0x20] sm:$0xf] %v323
    %356 = vst [vmem:[#allocation2 + $0x24] sm:$0xf] %v324
    %357 = vst [vmem:[#allocation2 + $0x28] sm:$0xf] %v325
    %358 = vst [vmem:[#allocation2 + $0x2c] sm:$0xf] %v326
    %359 = vst [vmem:[#allocation2 + $0x30] sm:$0xf] %v327
    %360 = vst [vmem:[#allocation2 + $0x34] sm:$0xf] %v328
    %361 = vst [vmem:[#allocation2 + $0x38] sm:$0xf] %v329
    %362 = vst [vmem:[#allocation2 + $0x3c] sm:$0xf] %v330
    // Predicated region
    $region18: #{tpu_custom_call.1} parent=1 // pred_check
      _
    $region19: #{tpu_custom_call.1} parent=1 // pred_check_branch
      %364 = sbr.rel (0) target = $region21
    $region20: #{tpu_custom_call.1} parent=1 // pred_region
      %s366 = ssub.s32 1024, 1024
      %367 = vsyncadd [#allocation3], %s366
      %s368 = sshll.u32 [#allocation2], 4
      %s369 = int_to_ptr.vmem [resolvable:$true] %s368
      %374 = dma.vmem_to_hbm [thread:$0]  %s369, 1024, %s4, [#allocation3], 64, 64, 4
    $region21: #{tpu_custom_call.1} parent=1 // pred_fallthru
      _
    // Predicated region
    $region22: #{tpu_custom_call.1} parent=1 // pred_check
      _
    $region23: #{tpu_custom_call.1} parent=1 // pred_check_branch
      %376 = sbr.rel (0) target = $region25
    $region24: #{tpu_custom_call.1} parent=1 // pred_region
      %377 = dma.done [#allocation3], 1024
    $region25: #{tpu_custom_call.1} parent=1 // pred_fallthru
      _
    %378 = vsyncpa [#allocation3], 1

</llo_original>
